<compile_context>
chip_gen: v7x
topology: tpu7x:2x2x1
jax: 0.10.0
libtpu: 0.0.40
codegen_flags: <defaults>
</compile_context>

<pallas_src>
import functools

import jax
import jax.numpy as jnp
from jax.experimental import pallas as pl
from jax.experimental.pallas import tpu as pltpu


def _round_up(n, m):
    return ((n + m - 1) // m) * m


def _device_kind():
    try:
        return jax.devices()[0].device_kind.lower()
    except Exception:
        return ""


def _num_tensorcores():
    # v7x has 2 TensorCores per chip sharing the "parallel" grid axis.
    return 2 if "v7" in _device_kind() else 1


def _default_compute_dtype():
    # bf16 VPU/EUP paths exist on v6e/v7x (halves vreg-granularity activation
    # work); v5e has no bf16 VPU/EUP, so bf16 would only add converts there.
    kind = _device_kind()
    if "v6" in kind or "v7" in kind:
        return jnp.bfloat16
    return jnp.float32


# ----------------------------- Pallas kernel ------------------------------ #
def _controller_kernel(*refs, constrained: bool, out_dim: int):
    if constrained:
        (x_ref, w1_ref, b1_ref, w2_ref, b2_ref, w3_ref, b3_ref,
         scale_ref, shift_ref, o_ref) = refs
    else:
        (x_ref, w1_ref, b1_ref, w2_ref, b2_ref, w3_ref, b3_ref, o_ref) = refs

    cdt = w1_ref.dtype                               # compute dtype (f32 / bf16)

    x = x_ref[...].astype(cdt)                       # in_scaling already in w1

    # Linear(in, h) + Softplus (f32 accumulation + bias, activation in cdt)
    h = jnp.dot(x, w1_ref[...], preferred_element_type=jnp.float32) + b1_ref[...]
    h = h.astype(cdt)
    h = jnp.where(h > 20.0, h, jnp.log1p(jnp.exp(h)))   # softplus, threshold form

    # Linear(h, h) + Tanh
    h = jnp.dot(h, w2_ref[...], preferred_element_type=jnp.float32) + b2_ref[...]
    h = jnp.tanh(h.astype(cdt))

    # Linear(h, out_pad) -- padded to 128 lanes for compute only
    y = jnp.dot(h, w3_ref[...], preferred_element_type=jnp.float32) + b3_ref[...]

    if constrained:
        # 0.5*(tanh(y)+1)*(hi-lo)+lo  ==  tanh(y)*scale + shift   (f32)
        y = jnp.tanh(y) * scale_ref[...] + shift_ref[...]

    # Store only the real output lanes; HBM output is (tb, out_dim).
    o_ref[...] = y[:, :out_dim].astype(o_ref.dtype)


# ------------------- one-time parameter preparation ------------------------ #
def prepare_params(params, *, compute_dtype=None, lane=128):
    """One-time transform of module parameters into kernel-friendly form.

    - folds in_scaling into w1
    - pads the output projection to a lane-dense width (compute-side only)
    - folds the box rescale into (scale, shift)
    - casts matmul operands to `compute_dtype` (biases stay f32);
      compute_dtype=None auto-selects bf16 on v6e/v7x, f32 otherwise.
    """
    if compute_dtype is None:
        compute_dtype = _default_compute_dtype()

    w1, b1, w2, b2, w3, b3, in_scaling, out_scaling = params
    out_dim = w3.shape[1]
    out_pad = _round_up(max(out_dim, lane), lane)

    w1s = (in_scaling[:, None] * w1).astype(compute_dtype)
    w2c = w2.astype(compute_dtype)
    w3p = jnp.zeros((w3.shape[0], out_pad), compute_dtype)
    w3p = w3p.at[:, :out_dim].set(w3.astype(compute_dtype))

    b1r = b1.reshape(1, -1).astype(jnp.float32)
    b2r = b2.reshape(1, -1).astype(jnp.float32)
    b3p = jnp.zeros((1, out_pad), jnp.float32).at[0, :out_dim].set(
        b3.astype(jnp.float32))

    lo = out_scaling[:, 0].astype(jnp.float32)
    hi = out_scaling[:, 1].astype(jnp.float32)
    scale = jnp.zeros((1, out_pad), jnp.float32).at[0, :out_dim].set(0.5 * (hi - lo))
    shift = jnp.zeros((1, out_pad), jnp.float32).at[0, :out_dim].set(0.5 * (hi + lo))

    return (w1s, b1r, w2c, b2r, w3p, b3p, scale, shift), out_dim


# ------------------------------ JAX wrapper -------------------------------- #
def box_constrained_controller(t, x, prepared, out_dim, *, constrained=False,
                               block_batch=4096):
    """Pallas-backed forward pass; `t` is unused (signature parity)."""
    del t
    w1, b1, w2, b2, w3, b3, scale, shift = prepared
    B, in_dim = x.shape

    # Fewest grid steps that still feed every TensorCore (even 2-way on v7x).
    n_tc = _num_tensorcores()
    tb = min(block_batch, _round_up(pl.cdiv(B, n_tc), 8))
    grid = (pl.cdiv(B, tb),)

    def resident(arr):                               # same block every step
        return pl.BlockSpec(arr.shape, lambda i: (0, 0))

    in_specs = [
        pl.BlockSpec((tb, in_dim), lambda i: (i, 0)),   # x: tiled over batch
        resident(w1), resident(b1),
        resident(w2), resident(b2),
        resident(w3), resident(b3),
    ]
    args = [x, w1, b1, w2, b2, w3, b3]
    if constrained:
        in_specs += [resident(scale), resident(shift)]
        args += [scale, shift]

    out_specs = pl.BlockSpec((tb, out_dim), lambda i: (i, 0))

    kernel = functools.partial(_controller_kernel,
                               constrained=constrained, out_dim=out_dim)
    return pl.pallas_call(
        kernel,
        out_shape=jax.ShapeDtypeStruct((B, out_dim), x.dtype),
        grid=grid,
        in_specs=in_specs,
        out_specs=out_specs,
        compiler_params=pltpu.CompilerParams(
            dimension_semantics=("parallel",)),      # v7x dual-TC sharding
    )(*args)


# ---------------------- deterministic parameter setup ---------------------- #
def init_params(key, in_dim, h_dim, out_dim, *, zero_init=True,
                input_scaling=None, output_scaling=None):
    """Mimics nn.Linear default init (U[-1/sqrt(fan_in), 1/sqrt(fan_in)])."""
    ks = jax.random.split(key, 6)

    def lin(kw, kb, fan_in, fan_out):
        bound = 1.0 / jnp.sqrt(fan_in)
        w = jax.random.uniform(kw, (fan_in, fan_out), jnp.float32, -bound, bound)
        b = jax.random.uniform(kb, (fan_out,), jnp.float32, -bound, bound)
        return w, b

    w1, b1 = lin(ks[0], ks[1], in_dim, h_dim)
    w2, b2 = lin(ks[2], ks[3], h_dim, h_dim)
    w3, b3 = lin(ks[4], ks[5], h_dim, out_dim)
    if zero_init:  # PyTorch `_init_zeros`: last layer weights and bias -> 0
        w3 = jnp.zeros_like(w3)
        b3 = jnp.zeros_like(b3)

    if input_scaling is None:
        input_scaling = jnp.ones((in_dim,), jnp.float32)
    if output_scaling is None:
        output_scaling = jnp.concatenate(
            [-jnp.ones((out_dim, 1), jnp.float32),
             jnp.ones((out_dim, 1), jnp.float32)], axis=-1)
    return (w1, b1, w2, b2, w3, b3, input_scaling, output_scaling)


# ------------------------------ JAX reference ------------------------------ #
def reference_forward(t, x, params, *, constrained=False):
    del t
    w1, b1, w2, b2, w3, b3, in_scaling, out_scaling = params
    h = jax.nn.softplus((x * in_scaling) @ w1 + b1)
    h = jnp.tanh(h @ w2 + b2)
    y = h @ w3 + b3
    if constrained:
        y = jnp.tanh(y)
        s0, s1 = out_scaling[:, 0], out_scaling[:, 1]
        y = 0.5 * (y + 1.0) * (s1 - s0) + s0
    return y


# ---------------------------------- main ----------------------------------- #
if __name__ == "__main__":
    key = jax.random.PRNGKey(0)
    in_dim, h_dim, out_dim = 4, 64, 3          # module defaults (h_dim=64)
    t = jnp.float32(0.0)                       # unused, parity with forward(t, x)

    k_x1, k_x2, k_p1, k_p2 = jax.random.split(key, 4)

    # Config 1: module defaults (zero_init=True, unconstrained), small batch,
    # f32 compute -> tight tolerance.  scale/shift args are dropped entirely.
    B1 = 8
    x1 = jax.random.normal(k_x1, (B1, in_dim), jnp.float32)
    params1 = init_params(k_p1, in_dim, h_dim, out_dim, zero_init=True)
    prep1, od1 = prepare_params(params1, compute_dtype=jnp.float32)
    y1 = box_constrained_controller(t, x1, prep1, od1, constrained=False)
    jax.block_until_ready(y1)
    ref1 = reference_forward(t, x1, params1, constrained=False)
    assert y1.shape == (B1, out_dim)
    assert jnp.allclose(y1, ref1, atol=1e-5, rtol=1e-5)

    # Config 2: constrained controller, non-trivial box, non-zero last layer,
    # larger batch (exercises batch tiling + weight residency), f32 compute.
    B2 = 1024
    x2 = jax.random.normal(k_x2, (B2, in_dim), jnp.float32)
    out_box = jnp.stack(
        [-2.0 * jnp.ones((out_dim,), jnp.float32),
         3.0 * jnp.ones((out_dim,), jnp.float32)], axis=-1)
    params2 = init_params(k_p2, in_dim, h_dim, out_dim,
                          zero_init=False, output_scaling=out_box)
    prep2, od2 = prepare_params(params2, compute_dtype=jnp.float32)
    y2 = box_constrained_controller(t, x2, prep2, od2, constrained=True)
    jax.block_until_ready(y2)
    ref2 = reference_forward(t, x2, params2, constrained=True)
    assert y2.shape == (B2, out_dim)
    assert jnp.allclose(y2, ref2, atol=1e-5, rtol=1e-5)

    # Config 3: explicit bf16 compute path (the v6e/v7x default); f32
    # accumulation keeps results close to the f32 reference.
    prep3, od3 = prepare_params(params2, compute_dtype=jnp.bfloat16)
    y3 = box_constrained_controller(t, x2, prep3, od3, constrained=True)
    jax.block_until_ready(y3)
    assert jnp.allclose(y3, ref2, atol=1e-1, rtol=0.0)

    # Config 4: auto dispatch (bf16 on v6e/v7x, f32 on v5e/unknown).
    prep4, od4 = prepare_params(params2)
    y4 = box_constrained_controller(t, x2, prep4, od4, constrained=True)
    jax.block_until_ready(y4)
    assert jnp.allclose(y4, ref2, atol=1e-1, rtol=0.0)

    print("KERNEL_OK")
</pallas_src>

<mosaic_0001>
module attributes {stable_mosaic.version = 11 : i64} {
  func.func @_controller_kernel(%arg0: i32, %arg1: memref<8x4xf32, #tpu.memory_space<vmem>>, %arg2: memref<4x64xf32, #tpu.memory_space<vmem>>, %arg3: memref<1x64xf32, #tpu.memory_space<vmem>>, %arg4: memref<64x64xf32, #tpu.memory_space<vmem>>, %arg5: memref<1x64xf32, #tpu.memory_space<vmem>>, %arg6: memref<64x128xf32, #tpu.memory_space<vmem>>, %arg7: memref<1x128xf32, #tpu.memory_space<vmem>>, %arg8: memref<8x3xf32, #tpu.memory_space<vmem>>) attributes {dimension_semantics = [#tpu.dimension_semantics<parallel>], iteration_bounds = array<i64: 1>, scalar_prefetch = 0 : i64, scratch_operands = 0 : i64, tpu.core_type = #tpu.core_type<tc>, window_params = [{transform_indices = @transform_0, window_bounds = array<i64: 8, 4>}, {pipeline_mode = #tpu.pipeline_mode<synchronous>, transform_indices = @transform_1, window_bounds = array<i64: 4, 64>}, {pipeline_mode = #tpu.pipeline_mode<synchronous>, transform_indices = @transform_2, window_bounds = array<i64: 1, 64>}, {pipeline_mode = #tpu.pipeline_mode<synchronous>, transform_indices = @transform_3, window_bounds = array<i64: 64, 64>}, {pipeline_mode = #tpu.pipeline_mode<synchronous>, transform_indices = @transform_4, window_bounds = array<i64: 1, 64>}, {pipeline_mode = #tpu.pipeline_mode<synchronous>, transform_indices = @transform_5, window_bounds = array<i64: 64, 128>}, {pipeline_mode = #tpu.pipeline_mode<synchronous>, transform_indices = @transform_6, window_bounds = array<i64: 1, 128>}, {transform_indices = @transform_7, window_bounds = array<i64: 8, 3>}]} {
    %c0 = arith.constant 0 : index
    %c0_0 = arith.constant 0 : index
    %0 = vector.load %arg1[%c0, %c0_0] : memref<8x4xf32, #tpu.memory_space<vmem>>, vector<8x4xf32>
    %c0_1 = arith.constant 0 : index
    %c0_2 = arith.constant 0 : index
    %1 = vector.load %arg2[%c0_1, %c0_2] : memref<4x64xf32, #tpu.memory_space<vmem>>, vector<4x64xf32>
    %cst = arith.constant dense<0.000000e+00> : vector<8x64xf32>
    %2 = tpu.matmul %0, %1, %cst {dimension_numbers = #tpu.dot_dimension_numbers<[1], [0], [0], [1], [0, 0, 1, 1], [], []>} : vector<8x4xf32>, vector<4x64xf32>, vector<8x64xf32> -> vector<8x64xf32>
    %c0_3 = arith.constant 0 : index
    %c0_4 = arith.constant 0 : index
    %3 = vector.load %arg3[%c0_3, %c0_4] : memref<1x64xf32, #tpu.memory_space<vmem>>, vector<1x64xf32>
    %4 = vector.broadcast %3 : vector<1x64xf32> to vector<8x64xf32>
    %5 = arith.addf %2, %4 : vector<8x64xf32>
    %cst_5 = arith.constant 2.000000e+01 : f32
    %6 = vector.broadcast %cst_5 : f32 to vector<8x64xf32>
    %7 = arith.cmpf ogt, %5, %6 : vector<8x64xf32>
    %8 = math.exp %5 : vector<8x64xf32>
    %9 = math.log1p %8 : vector<8x64xf32>
    %10 = arith.select %7, %5, %9 : vector<8x64xi1>, vector<8x64xf32>
    %c0_6 = arith.constant 0 : index
    %c0_7 = arith.constant 0 : index
    %11 = vector.load %arg4[%c0_6, %c0_7] : memref<64x64xf32, #tpu.memory_space<vmem>>, vector<64x64xf32>
    %cst_8 = arith.constant dense<0.000000e+00> : vector<8x64xf32>
    %12 = tpu.matmul %10, %11, %cst_8 {dimension_numbers = #tpu.dot_dimension_numbers<[1], [0], [0], [1], [0, 0, 1, 1], [], []>} : vector<8x64xf32>, vector<64x64xf32>, vector<8x64xf32> -> vector<8x64xf32>
    %c0_9 = arith.constant 0 : index
    %c0_10 = arith.constant 0 : index
    %13 = vector.load %arg5[%c0_9, %c0_10] : memref<1x64xf32, #tpu.memory_space<vmem>>, vector<1x64xf32>
    %14 = vector.broadcast %13 : vector<1x64xf32> to vector<8x64xf32>
    %15 = arith.addf %12, %14 : vector<8x64xf32>
    %16 = math.tanh %15 : vector<8x64xf32>
    %c0_11 = arith.constant 0 : index
    %c0_12 = arith.constant 0 : index
    %17 = vector.load %arg6[%c0_11, %c0_12] : memref<64x128xf32, #tpu.memory_space<vmem>>, vector<64x128xf32>
    %cst_13 = arith.constant dense<0.000000e+00> : vector<8x128xf32>
    %18 = tpu.matmul %16, %17, %cst_13 {dimension_numbers = #tpu.dot_dimension_numbers<[1], [0], [0], [1], [0, 0, 1, 1], [], []>} : vector<8x64xf32>, vector<64x128xf32>, vector<8x128xf32> -> vector<8x128xf32>
    %c0_14 = arith.constant 0 : index
    %c0_15 = arith.constant 0 : index
    %19 = vector.load %arg7[%c0_14, %c0_15] : memref<1x128xf32, #tpu.memory_space<vmem>>, vector<1x128xf32>
    %20 = vector.broadcast %19 : vector<1x128xf32> to vector<8x128xf32>
    %21 = arith.addf %18, %20 : vector<8x128xf32>
    %22 = vector.extract_strided_slice %21 {offsets = [0, 0], sizes = [8, 3], strides = [1, 1]} : vector<8x128xf32> to vector<8x3xf32>
    %c0_16 = arith.constant 0 : index
    %c0_17 = arith.constant 0 : index
    %23 = vector.load %arg8[%c0_16, %c0_17] : memref<8x3xf32, #tpu.memory_space<vmem>>, vector<8x3xf32>
    tpu.vector_store %arg8[%c0_16, %c0_17], %22 {strides = array<i32>} : memref<8x3xf32, #tpu.memory_space<vmem>>, vector<8x3xf32>,
    return
  }
  func.func @transform_0(%arg0: i32) -> (i32, i32) {
    %c0_i32 = arith.constant 0 : i32
    %c0_i32_0 = arith.constant 0 : i32
    return %arg0, %c0_i32 : i32, i32
  }
  func.func @transform_1(%arg0: i32) -> (i32, i32) {
    %c0_i32 = arith.constant 0 : i32
    %c0_i32_0 = arith.constant 0 : i32
    %c0_i32_1 = arith.constant 0 : i32
    return %c0_i32, %c0_i32_0 : i32, i32
  }
  func.func @transform_2(%arg0: i32) -> (i32, i32) {
    %c0_i32 = arith.constant 0 : i32
    %c0_i32_0 = arith.constant 0 : i32
    %c0_i32_1 = arith.constant 0 : i32
    return %c0_i32, %c0_i32_0 : i32, i32
  }
  func.func @transform_3(%arg0: i32) -> (i32, i32) {
    %c0_i32 = arith.constant 0 : i32
    %c0_i32_0 = arith.constant 0 : i32
    %c0_i32_1 = arith.constant 0 : i32
    return %c0_i32, %c0_i32_0 : i32, i32
  }
  func.func @transform_4(%arg0: i32) -> (i32, i32) {
    %c0_i32 = arith.constant 0 : i32
    %c0_i32_0 = arith.constant 0 : i32
    %c0_i32_1 = arith.constant 0 : i32
    return %c0_i32, %c0_i32_0 : i32, i32
  }
  func.func @transform_5(%arg0: i32) -> (i32, i32) {
    %c0_i32 = arith.constant 0 : i32
    %c0_i32_0 = arith.constant 0 : i32
    %c0_i32_1 = arith.constant 0 : i32
    return %c0_i32, %c0_i32_0 : i32, i32
  }
  func.func @transform_6(%arg0: i32) -> (i32, i32) {
    %c0_i32 = arith.constant 0 : i32
    %c0_i32_0 = arith.constant 0 : i32
    %c0_i32_1 = arith.constant 0 : i32
    return %c0_i32, %c0_i32_0 : i32, i32
  }
  func.func @transform_7(%arg0: i32) -> (i32, i32) {
    %c0_i32 = arith.constant 0 : i32
    %c0_i32_0 = arith.constant 0 : i32
    return %arg0, %c0_i32 : i32, i32
  }
}

</mosaic_0001>

<llo_original>
// kernel: tpu_custom_call.1
$region0: #{tpu_custom_call.1}
  #allocation0 [shape = 'u32[]', space=smem, size = 0x4, offset = 0x4, fixed_abs, tag = 'smem constant byte address 0x4 - core index']
  #allocation1 [shape = 'u32[144,128]{1,0:T(1,128)}', space=vmem, size = 0x12000, scoped, tag = 'internal scratch']
  %s0 = inlined_call_operand.vmem [shape: f32[8,4], index: 0, kind: input, shape index: {}]
  %s1 = inlined_call_operand.vmem [shape: f32[4,64], index: 1, kind: input, shape index: {}]
  %s2 = inlined_call_operand.vmem [shape: f32[1,64], index: 2, kind: input, shape index: {}]
  %s3 = inlined_call_operand.hbm [shape: f32[64,64], index: 3, kind: input, shape index: {}]
  %s4 = inlined_call_operand.vmem [shape: f32[1,64], index: 4, kind: input, shape index: {}]
  %s5 = inlined_call_operand.hbm [shape: f32[64,128], index: 5, kind: input, shape index: {}]
  %s6 = inlined_call_operand.vmem [shape: f32[1,128], index: 6, kind: input, shape index: {}]
  %s7 = inlined_call_operand.vmem [shape: f32[8,3], index: 7, kind: output, shape index: {}]
  %s8 = sld [smem:[#allocation0]]
  $region46: #{tpu_custom_call.1} parent=0
    _
  %s10 = ssub.s32 1, %s8
  %s11 = scalar_select 0, %s10, %s8
  $region1: #{tpu_custom_call.1} parent=0
    #allocation2 [shape = 'u8[32768]{0}', space=vmem, size = 0x8000, scoped, tag = 'input window, operand 3, single buffered']
    #allocation3 [shape = 's32[1]{0}', space=sflag, size = 0x4, scoped, tag = 'scoped memory for tpu_custom_call.1']
    #allocation4 [shape = 'u8[32768]{0}', space=vmem, size = 0x8000, scoped, tag = 'input window, operand 5, single buffered']
    #allocation5 [shape = 's32[1]{0}', space=sflag, size = 0x4, scoped, tag = 'scoped memory for tpu_custom_call.1']
    %12 = vsyncpa [#allocation3], 0
    %13 = vsyncpa [#allocation5], 0
    // Predicated region
    $region2: #{tpu_custom_call.1} parent=1 // pred_check
      _
    $region3: #{tpu_custom_call.1} parent=1 // pred_check_branch
      %15 = sbr.rel (0) target = $region5
    $region4: #{tpu_custom_call.1} parent=1 // pred_region
      _
    $region5: #{tpu_custom_call.1} parent=1 // pred_fallthru
      _
    // Predicated region
    $region6: #{tpu_custom_call.1} parent=1 // pred_check
      _
    $region7: #{tpu_custom_call.1} parent=1 // pred_check_branch
      %17 = sbr.rel (0) target = $region9
    $region8: #{tpu_custom_call.1} parent=1 // pred_region
      _
    $region9: #{tpu_custom_call.1} parent=1 // pred_fallthru
      _
    // Predicated region
    $region10: #{tpu_custom_call.1} parent=1 // pred_check
      _
    $region11: #{tpu_custom_call.1} parent=1 // pred_check_branch
      %19 = sbr.rel (0) target = $region13
    $region12: #{tpu_custom_call.1} parent=1 // pred_region
      _
    $region13: #{tpu_custom_call.1} parent=1 // pred_fallthru
      _
    // Predicated region
    $region14: #{tpu_custom_call.1} parent=1 // pred_check
      _
    $region15: #{tpu_custom_call.1} parent=1 // pred_check_branch
      %21 = sbr.rel (0) target = $region17
    $region16: #{tpu_custom_call.1} parent=1 // pred_region
      %s23 = ssub.s32 1024, 1024
      %24 = vsyncadd [#allocation3], %s23
      %s25 = sshll.u32 [#allocation2], 4
      %s26 = int_to_ptr.vmem [resolvable:$true] %s25
      %31 = dma.hbm_to_vmem [thread:$0]  %s3, 1024, %s26, [#allocation3], 128, 128, 8
    $region17: #{tpu_custom_call.1} parent=1 // pred_fallthru
      _
    // Predicated region
    $region18: #{tpu_custom_call.1} parent=1 // pred_check
      _
    $region19: #{tpu_custom_call.1} parent=1 // pred_check_branch
      %33 = sbr.rel (0) target = $region21
    $region20: #{tpu_custom_call.1} parent=1 // pred_region
      _
    $region21: #{tpu_custom_call.1} parent=1 // pred_fallthru
      _
    // Predicated region
    $region22: #{tpu_custom_call.1} parent=1 // pred_check
      _
    $region23: #{tpu_custom_call.1} parent=1 // pred_check_branch
      %35 = sbr.rel (0) target = $region25
    $region24: #{tpu_custom_call.1} parent=1 // pred_region
      %s37 = ssub.s32 1024, 1024
      %38 = vsyncadd [#allocation5], %s37
      %s39 = sshll.u32 [#allocation4], 4
      %s40 = int_to_ptr.vmem [resolvable:$true] %s39
      %45 = dma.hbm_to_vmem [thread:$0]  %s5, 1024, %s40, [#allocation5], 128, 128, 8
    $region25: #{tpu_custom_call.1} parent=1 // pred_fallthru
      _
    // Predicated region
    $region26: #{tpu_custom_call.1} parent=1 // pred_check
      _
    $region27: #{tpu_custom_call.1} parent=1 // pred_check_branch
      %47 = sbr.rel (0) target = $region29
    $region28: #{tpu_custom_call.1} parent=1 // pred_region
      _
    $region29: #{tpu_custom_call.1} parent=1 // pred_fallthru
      _
    // Predicated region
    $region30: #{tpu_custom_call.1} parent=1 // pred_check
      _
    $region31: #{tpu_custom_call.1} parent=1 // pred_check_branch
      %49 = sbr.rel (0) target = $region33
    $region32: #{tpu_custom_call.1} parent=1 // pred_region
      %50 = dma.done [#allocation3], 1024
    $region33: #{tpu_custom_call.1} parent=1 // pred_fallthru
      _
    // Predicated region
    $region34: #{tpu_custom_call.1} parent=1 // pred_check
      _
    $region35: #{tpu_custom_call.1} parent=1 // pred_check_branch
      %52 = sbr.rel (0) target = $region37
    $region36: #{tpu_custom_call.1} parent=1 // pred_region
      %53 = dma.done [#allocation5], 1024
    $region37: #{tpu_custom_call.1} parent=1 // pred_fallthru
      _
    %v54 = vld [vmem:[%s0] sm:$0xff]
    %v55 = vld [vmem:[%s1] sm:$0xf]
    %v56 = vld [vmem:[%s2] sm:$0x1]
    %v58 = vlaneseq
    %v59 = vshrl.u32 %v58, 7
    %v60 = vsub.s32 0, %v59
    %v61 = vrot.slane %v56, %v60
    %vm63 = vcmask 31744
    %v65 = vsel %vm63, %v54, 0
    %vm67 = vcmask 1043456
    %v69 = vsel %vm67, %v55, 0
    %71 = vmatprep.subr.mxu0 0.0
    %72 = vmatpush1.msra.mxu0 %v69
    %73 = vmatprep.subr.mxu0 0.0
    %74 = vmatpush1.msra.mxu0 0.0
    %75 = vmatprep.subr.mxu0 0.0
    %76 = vmatpush1.msra.mxu0 0.0
    %77 = vmatprep.subr.mxu0 0.0
    %78 = vmatpush1.msra.mxu0 0.0
    %79 = vmatprep.subr.mxu0 0.0
    %80 = vmatpush1.msra.mxu0 0.0
    %81 = vmatprep.subr.mxu0 0.0
    %82 = vmatpush1.msra.mxu0 0.0
    %83 = vmatprep.subr.mxu0 0.0
    %84 = vmatpush1.msra.mxu0 0.0
    %85 = vmatprep.subr.mxu0 0.0
    %86 = vmatpush1.msra.mxu0 0.0
    %87 = vmatprep.subr.mxu0 0.0
    %88 = vmatpush1.msra.mxu0 0.0
    %89 = vmatprep.subr.mxu0 0.0
    %90 = vmatpush1.msra.mxu0 0.0
    %91 = vmatprep.subr.mxu0 0.0
    %92 = vmatpush1.msra.mxu0 0.0
    %93 = vmatprep.subr.mxu0 0.0
    %94 = vmatpush1.msra.mxu0 0.0
    %95 = vmatprep.subr.mxu0 0.0
    %96 = vmatpush1.msra.mxu0 0.0
    %97 = vmatprep.subr.mxu0 0.0
    %98 = vmatpush1.msra.mxu0 0.0
    %99 = vmatprep.subr.mxu0 0.0
    %100 = vmatpush1.msra.mxu0 0.0
    %101 = vmatprep.subr.mxu0 0.0
    %102 = vmatpush1.msra.mxu0 0.0
    %103 = vmatprep.subr.mxu0 0.0
    %104 = vmatpush1.msra.mxu0 0.0
    %105 = vmatprep.subr.mxu0 0.0
    %106 = vmatpush1.msra.mxu0 0.0
    %107 = vmatprep.subr.mxu0 0.0
    %108 = vmatpush1.msra.mxu0 0.0
    %109 = vmatprep.subr.mxu0 0.0
    %110 = vmatpush1.msra.mxu0 0.0
    %111 = vmatprep.subr.mxu0 0.0
    %112 = vmatpush1.msra.mxu0 0.0
    %113 = vmatprep.subr.mxu0 0.0
    %114 = vmatpush1.msra.mxu0 0.0
    %115 = vmatprep.subr.mxu0 0.0
    %116 = vmatpush1.msra.mxu0 0.0
    %117 = vmatprep.subr.mxu0 0.0
    %118 = vmatpush1.msra.mxu0 0.0
    %119 = vmatprep.subr.mxu0 0.0
    %120 = vmatpush1.msra.mxu0 0.0
    %121 = vmatprep.subr.mxu0 0.0
    %122 = vmatpush1.msra.mxu0 0.0
    %123 = vmatprep.subr.mxu0 0.0
    %124 = vmatpush1.msra.mxu0 0.0
    %125 = vmatprep.subr.mxu0 0.0
    %126 = vmatpush1.msra.mxu0 0.0
    %127 = vmatprep.subr.mxu0 0.0
    %128 = vmatpush1.msra.mxu0 0.0
    %129 = vmatprep.subr.mxu0 0.0
    %130 = vmatpush1.msra.mxu0 0.0
    %131 = vmatprep.subr.mxu0 0.0
    %132 = vmatpush1.msra.mxu0 0.0
    %133 = vmatprep.subr.mxu0 0.0
    %134 = vmatpush1.msra.mxu0 0.0
    %135 = vmatprep.mubr.f32.mxu0 0.0
    %136 = vmatmul.mubr.f32.gmra.mrb[0].mxu0 %v65
    %v137 = vpop.f32.mrb[0].mxu0
    %v138 = vadd.f32 %v61, %v137
    %v139 = vpop.f32.mrb[0].mxu0
    %140 = vdwg.mxu0
    %vm141 = vcmp.gt.f32.partialorder %v138, 20.0
    %v142 = vmul.f32 %v138, 1.442695
    %v143 = vpow.pop %v142
    %v144 = vadd.f32 %v143, 1.0
    %v145 = vlog2.pop %v144
    %v146 = vmul.f32 %v145, 0.6931472
    %v147 = vmul.f32 -0.5, %v143
    %v148 = vadd.f32 %v147, 1.0
    %v149 = vmul.f32 %v148, %v143
    %v150 = vand.u32 2147483647, %v143
    %vm151 = vcmp.lt.f32.partialorder %v150, 0.0004427343
    %v152 = vsel %vm151, %v149, %v146
    %v153 = vsel %vm141, %v138, %v152
    %v154 = vld [vmem:[#allocation2] sm:$0xff]
    %v155 = vld [vmem:[#allocation2 + $0x8] sm:$0xff]
    %v156 = vld [vmem:[#allocation2 + $0x10] sm:$0xff]
    %v157 = vld [vmem:[#allocation2 + $0x18] sm:$0xff]
    %v158 = vld [vmem:[#allocation2 + $0x20] sm:$0xff]
    %v159 = vld [vmem:[#allocation2 + $0x28] sm:$0xff]
    %v160 = vld [vmem:[#allocation2 + $0x30] sm:$0xff]
    %v161 = vld [vmem:[#allocation2 + $0x38] sm:$0xff]
    %v162 = vld [vmem:[%s4] sm:$0x1]
    %v164 = vlaneseq
    %v165 = vshrl.u32 %v164, 7
    %v166 = vsub.s32 0, %v165
    %v167 = vrot.slane %v162, %v166
    %vm169 = vcmask 523264
    %v171 = vsel %vm169, %v153, 0
    %173 = vmatprep.subr.mxu0 0.0
    %174 = vmatpush1.msra.mxu0 %v154
    %175 = vmatprep.subr.mxu0 0.0
    %176 = vmatpush1.msra.mxu0 %v155
    %177 = vmatprep.subr.mxu0 0.0
    %178 = vmatpush1.msra.mxu0 %v156
    %179 = vmatprep.subr.mxu0 0.0
    %180 = vmatpush1.msra.mxu0 %v157
    %181 = vmatprep.subr.mxu0 0.0
    %182 = vmatpush1.msra.mxu0 %v158
    %183 = vmatprep.subr.mxu0 0.0
    %184 = vmatpush1.msra.mxu0 %v159
    %185 = vmatprep.subr.mxu0 0.0
    %186 = vmatpush1.msra.mxu0 %v160
    %187 = vmatprep.subr.mxu0 0.0
    %188 = vmatpush1.msra.mxu0 %v161
    %189 = vmatprep.subr.mxu0 0.0
    %190 = vmatpush1.msra.mxu0 0.0
    %191 = vmatprep.subr.mxu0 0.0
    %192 = vmatpush1.msra.mxu0 0.0
    %193 = vmatprep.subr.mxu0 0.0
    %194 = vmatpush1.msra.mxu0 0.0
    %195 = vmatprep.subr.mxu0 0.0
    %196 = vmatpush1.msra.mxu0 0.0
    %197 = vmatprep.subr.mxu0 0.0
    %198 = vmatpush1.msra.mxu0 0.0
    %199 = vmatprep.subr.mxu0 0.0
    %200 = vmatpush1.msra.mxu0 0.0
    %201 = vmatprep.subr.mxu0 0.0
    %202 = vmatpush1.msra.mxu0 0.0
    %203 = vmatprep.subr.mxu0 0.0
    %204 = vmatpush1.msra.mxu0 0.0
    %205 = vmatprep.subr.mxu0 0.0
    %206 = vmatpush1.msra.mxu0 0.0
    %207 = vmatprep.subr.mxu0 0.0
    %208 = vmatpush1.msra.mxu0 0.0
    %209 = vmatprep.subr.mxu0 0.0
    %210 = vmatpush1.msra.mxu0 0.0
    %211 = vmatprep.subr.mxu0 0.0
    %212 = vmatpush1.msra.mxu0 0.0
    %213 = vmatprep.subr.mxu0 0.0
    %214 = vmatpush1.msra.mxu0 0.0
    %215 = vmatprep.subr.mxu0 0.0
    %216 = vmatpush1.msra.mxu0 0.0
    %217 = vmatprep.subr.mxu0 0.0
    %218 = vmatpush1.msra.mxu0 0.0
    %219 = vmatprep.subr.mxu0 0.0
    %220 = vmatpush1.msra.mxu0 0.0
    %221 = vmatprep.subr.mxu0 0.0
    %222 = vmatpush1.msra.mxu0 0.0
    %223 = vmatprep.subr.mxu0 0.0
    %224 = vmatpush1.msra.mxu0 0.0
    %225 = vmatprep.subr.mxu0 0.0
    %226 = vmatpush1.msra.mxu0 0.0
    %227 = vmatprep.subr.mxu0 0.0
    %228 = vmatpush1.msra.mxu0 0.0
    %229 = vmatprep.subr.mxu0 0.0
    %230 = vmatpush1.msra.mxu0 0.0
    %231 = vmatprep.subr.mxu0 0.0
    %232 = vmatpush1.msra.mxu0 0.0
    %233 = vmatprep.subr.mxu0 0.0
    %234 = vmatpush1.msra.mxu0 0.0
    %235 = vmatprep.subr.mxu0 0.0
    %236 = vmatpush1.msra.mxu0 0.0
    %237 = vmatprep.mubr.f32.mxu0 0.0
    %238 = vmatmul.mubr.f32.gmra.mrb[0].mxu0 %v171
    %v239 = vpop.f32.mrb[0].mxu0
    %v240 = vadd.f32 %v167, %v239
    %v241 = vpop.f32.mrb[0].mxu0
    %242 = vdwg.mxu0
    %v243 = vtanh.pop %v240
    %v244 = vld [vmem:[#allocation4] sm:$0xff]
    %v245 = vld [vmem:[#allocation4 + $0x8] sm:$0xff]
    %v246 = vld [vmem:[#allocation4 + $0x10] sm:$0xff]
    %v247 = vld [vmem:[#allocation4 + $0x18] sm:$0xff]
    %v248 = vld [vmem:[#allocation4 + $0x20] sm:$0xff]
    %v249 = vld [vmem:[#allocation4 + $0x28] sm:$0xff]
    %v250 = vld [vmem:[#allocation4 + $0x30] sm:$0xff]
    %v251 = vld [vmem:[#allocation4 + $0x38] sm:$0xff]
    %v252 = vld [vmem:[%s6] sm:$0x1]
    %v254 = vlaneseq
    %v255 = vshrl.u32 %v254, 7
    %v256 = vsub.s32 0, %v255
    %v257 = vrot.slane %v252, %v256
    %v260 = vsel %vm169, %v243, 0
    %262 = vmatprep.subr.mxu0 0.0
    %263 = vmatpush1.msra.mxu0 %v244
    %264 = vmatprep.subr.mxu0 0.0
    %265 = vmatpush1.msra.mxu0 %v245
    %266 = vmatprep.subr.mxu0 0.0
    %267 = vmatpush1.msra.mxu0 %v246
    %268 = vmatprep.subr.mxu0 0.0
    %269 = vmatpush1.msra.mxu0 %v247
    %270 = vmatprep.subr.mxu0 0.0
    %271 = vmatpush1.msra.mxu0 %v248
    %272 = vmatprep.subr.mxu0 0.0
    %273 = vmatpush1.msra.mxu0 %v249
    %274 = vmatprep.subr.mxu0 0.0
    %275 = vmatpush1.msra.mxu0 %v250
    %276 = vmatprep.subr.mxu0 0.0
    %277 = vmatpush1.msra.mxu0 %v251
    %278 = vmatprep.subr.mxu0 0.0
    %279 = vmatpush1.msra.mxu0 0.0
    %280 = vmatprep.subr.mxu0 0.0
    %281 = vmatpush1.msra.mxu0 0.0
    %282 = vmatprep.subr.mxu0 0.0
    %283 = vmatpush1.msra.mxu0 0.0
    %284 = vmatprep.subr.mxu0 0.0
    %285 = vmatpush1.msra.mxu0 0.0
    %286 = vmatprep.subr.mxu0 0.0
    %287 = vmatpush1.msra.mxu0 0.0
    %288 = vmatprep.subr.mxu0 0.0
    %289 = vmatpush1.msra.mxu0 0.0
    %290 = vmatprep.subr.mxu0 0.0
    %291 = vmatpush1.msra.mxu0 0.0
    %292 = vmatprep.subr.mxu0 0.0
    %293 = vmatpush1.msra.mxu0 0.0
    %294 = vmatprep.subr.mxu0 0.0
    %295 = vmatpush1.msra.mxu0 0.0
    %296 = vmatprep.subr.mxu0 0.0
    %297 = vmatpush1.msra.mxu0 0.0
    %298 = vmatprep.subr.mxu0 0.0
    %299 = vmatpush1.msra.mxu0 0.0
    %300 = vmatprep.subr.mxu0 0.0
    %301 = vmatpush1.msra.mxu0 0.0
    %302 = vmatprep.subr.mxu0 0.0
    %303 = vmatpush1.msra.mxu0 0.0
    %304 = vmatprep.subr.mxu0 0.0
    %305 = vmatpush1.msra.mxu0 0.0
    %306 = vmatprep.subr.mxu0 0.0
    %307 = vmatpush1.msra.mxu0 0.0
    %308 = vmatprep.subr.mxu0 0.0
    %309 = vmatpush1.msra.mxu0 0.0
    %310 = vmatprep.subr.mxu0 0.0
    %311 = vmatpush1.msra.mxu0 0.0
    %312 = vmatprep.subr.mxu0 0.0
    %313 = vmatpush1.msra.mxu0 0.0
    %314 = vmatprep.subr.mxu0 0.0
    %315 = vmatpush1.msra.mxu0 0.0
    %316 = vmatprep.subr.mxu0 0.0
    %317 = vmatpush1.msra.mxu0 0.0
    %318 = vmatprep.subr.mxu0 0.0
    %319 = vmatpush1.msra.mxu0 0.0
    %320 = vmatprep.subr.mxu0 0.0
    %321 = vmatpush1.msra.mxu0 0.0
    %322 = vmatprep.subr.mxu0 0.0
    %323 = vmatpush1.msra.mxu0 0.0
    %324 = vmatprep.subr.mxu0 0.0
    %325 = vmatpush1.msra.mxu0 0.0
    %326 = vmatprep.mubr.f32.mxu0 0.0
    %327 = vmatmul.mubr.f32.gmra.mrb[0].mxu0 %v260
    %v328 = vpop.f32.mrb[0].mxu0
    %v329 = vadd.f32 %v257, %v328
    %v330 = vpop.f32.mrb[0].mxu0
    %331 = vdwg.mxu0
    %vm332 = vcmask 23552
    %333 = vst.msk [vmem:[%s7] sm:$0xff] %vm332, %v329
    // Predicated region
    $region38: #{tpu_custom_call.1} parent=1 // pred_check
      _
    $region39: #{tpu_custom_call.1} parent=1 // pred_check_branch
      %335 = sbr.rel (0) target = $region41
    $region40: #{tpu_custom_call.1} parent=1 // pred_region
      _
    $region41: #{tpu_custom_call.1} parent=1 // pred_fallthru
      _
    // Predicated region
    $region42: #{tpu_custom_call.1} parent=1 // pred_check
      _
    $region43: #{tpu_custom_call.1} parent=1 // pred_check_branch
      %337 = sbr.rel (0) target = $region45
    $region44: #{tpu_custom_call.1} parent=1 // pred_region
      _
    $region45: #{tpu_custom_call.1} parent=1 // pred_fallthru
      _
    %338 = vsyncpa [#allocation3], 1
    %339 = vsyncpa [#allocation5], 1

</llo_original>
